<compile_context>
chip_gen: v7x
topology: tpu7x:2x2x1
jax: 0.10.0
libtpu: 0.0.40
codegen_flags: <defaults>
</compile_context>

<pallas_src>
import functools

import jax
import jax.numpy as jnp
from jax import lax
from jax.experimental import pallas as pl
from jax.experimental.pallas import tpu as pltpu
import numpy as np

_LANES = 128
_SUBLANES = 8


def _round_up(v, m):
    return (v + m - 1) // m * m


def _softplus(z):
    # numerically stable softplus: log(1 + exp(z)); one exp + one log1p (EUP).
    return jnp.log1p(jnp.exp(-jnp.abs(z))) + jnp.maximum(z, 0.0)


def _myloss_kernel(x_ref, y_ref, tgt_ref, pw_ref, out_ref,
                   w_pos_sc, pw_oh_sc,
                   *, num_exit_points, count, b_real, c_real, tile_b):
    """One (batch-tile i, exit-point e) grid step.

    x_ref:   [TB, Cp]   main logits (zero-padded rows/cols)
    y_ref:   [TB, Cp]   exit-point-e logits (E dim squeezed by BlockSpec)
    tgt_ref: [TB, 1]    int32 class ids (0 in padded rows)
    pw_ref:  [1, Cp]    BCE pos_weight (padded cols masked in-kernel)
    out_ref: [8, 128]   per-batch-tile partial-loss accumulator (value at [0,0])
    w_pos_sc, pw_oh_sc: [TB, Cp] f32 scratch, invariant over the exit axis
    """
    i = pl.program_id(0)
    e = pl.program_id(1)
    tbc, cp = w_pos_sc.shape

    zero_mask = (
        (lax.broadcasted_iota(jnp.int32, (_SUBLANES, _LANES), 0) == 0)
        & (lax.broadcasted_iota(jnp.int32, (_SUBLANES, _LANES), 1) == 0)
    )

    # ---- e == 0: cache masked one-hot products, add the CE term ------------
    @pl.when(e == 0)
    def _():
        x = x_ref[...].astype(jnp.float32)                           # [TB, Cp]
        cls_iota = lax.broadcasted_iota(jnp.int32, (tbc, cp), 1)
        row_iota = lax.broadcasted_iota(jnp.int32, (tbc, 1), 0)
        col_valid_b = cls_iota < c_real                              # [TB, Cp]
        col_valid = col_valid_b.astype(jnp.float32)
        row_valid = (i * tile_b + row_iota < b_real).astype(jnp.float32)  # [TB,1]
        onehot = (cls_iota == tgt_ref[...]).astype(jnp.float32)      # [TB, Cp]
        valid = row_valid * col_valid                                # [TB, Cp]
        pw = pw_ref[...].astype(jnp.float32)                         # [1, Cp]

        # Loop-invariant (over e) BCE factors, with the validity mask folded in:
        #   per_elem = softplus(z) * w_pos - (pw * onehot) * z
        pw_oh_sc[...] = pw * onehot * valid
        w_pos_sc[...] = (1.0 + (pw - 1.0) * onehot) * valid

        # CrossEntropyLoss, mean over the real batch.
        xm = jnp.where(col_valid_b, x, jnp.float32(-1e30))
        m = jnp.max(xm, axis=-1, keepdims=True)                      # [TB, 1]
        lse = m + jnp.log(jnp.sum(jnp.exp(xm - m), axis=-1, keepdims=True))
        picked = jnp.sum(x * onehot, axis=-1, keepdims=True)         # [TB, 1]
        ce = jnp.sum((lse - picked) * row_valid) * jnp.float32(1.0 / b_real)
        out_ref[...] = jnp.where(zero_mask, ce, jnp.float32(0.0))

    # ---- BCEWithLogitsLoss(pos_weight) contribution of exit e --------------
    z = y_ref[...].astype(jnp.float32)                               # [TB, Cp]
    sp = _softplus(z)                          # softplus(-z) == sp - z (1 EUP op)
    per_elem = sp * w_pos_sc[...] - pw_oh_sc[...] * z
    e_f = e.astype(jnp.float32)
    weight = 1.0 / (jnp.float32(num_exit_points + 1) - e_f)
    scale = weight * jnp.float32(1.0 / (b_real * c_real * count))
    bce = jnp.sum(per_elem) * scale
    out_ref[...] += jnp.where(zero_mask, bce, jnp.float32(0.0))


def my_loss(x, y_stacked, target, pos_weight_vec, *, num_exit_points, count=1,
            batch_tile=None):
    """x: [B, C]; y_stacked: [E, B, C]; target: [B] int; pos_weight_vec: [C]."""
    B, C = x.shape
    E = y_stacked.shape[0]

    Cp = _round_up(C, _LANES)
    if batch_tile is None:
        # Keep tiles modest (a few MiB double-buffered) so even v7x's 64 MiB
        # VMEM is never the limiter; tiny batches just use one tile.
        batch_tile = min(_round_up(B, _SUBLANES), 256)
    TB = _round_up(batch_tile, _SUBLANES)
    Bp = _round_up(B, TB)
    NT = Bp // TB

    # Zero-pad; padded rows/cols are masked inside the kernel.
    xp = jnp.zeros((Bp, Cp), x.dtype).at[:B, :C].set(x)
    yp = jnp.zeros((E, Bp, Cp), y_stacked.dtype).at[:, :B, :C].set(y_stacked)
    tgtp = jnp.zeros((Bp, 1), jnp.int32).at[:B, 0].set(target.astype(jnp.int32))
    pwp = jnp.zeros((1, Cp), jnp.float32).at[0, :C].set(
        pos_weight_vec.astype(jnp.float32))

    kernel = functools.partial(
        _myloss_kernel, num_exit_points=num_exit_points, count=count,
        b_real=B, c_real=C, tile_b=TB)

    isz_x = np.dtype(x.dtype).itemsize
    isz_y = np.dtype(y_stacked.dtype).itemsize
    # double-buffered inputs/output + two f32 scratch tiles + slack
    vmem_bytes = (2 * (TB * Cp * isz_x + TB * Cp * isz_y + TB * 4 + Cp * 4
                       + _SUBLANES * _LANES * 4)
                  + 2 * TB * Cp * 4 + (2 << 20))
    vmem_bytes = int(min(max(vmem_bytes, 32 << 20), 96 << 20))

    cost = pl.CostEstimate(
        flops=int(6 * (E + 1) * Bp * Cp),
        transcendentals=int(2 * (E + 1) * Bp * Cp),
        bytes_accessed=int(E * Bp * Cp * isz_y + Bp * Cp * isz_x
                           + Bp * 4 + Cp * 4 + NT * _SUBLANES * _LANES * 4),
    )

    partials = pl.pallas_call(
        kernel,
        out_shape=jax.ShapeDtypeStruct((NT, _SUBLANES, _LANES), jnp.float32),
        grid_spec=pltpu.PrefetchScalarGridSpec(
            num_scalar_prefetch=0,
            grid=(NT, E),
            in_specs=[
                pl.BlockSpec((TB, Cp), lambda i, e: (i, 0)),
                pl.BlockSpec((pl.Squeezed(), TB, Cp), lambda i, e: (e, i, 0)),
                pl.BlockSpec((TB, 1), lambda i, e: (i, 0)),
                pl.BlockSpec((1, Cp), lambda i, e: (0, 0)),
            ],
            out_specs=pl.BlockSpec((pl.Squeezed(), _SUBLANES, _LANES),
                                   lambda i, e: (i, 0, 0)),
            scratch_shapes=[pltpu.VMEM((TB, Cp), jnp.float32),
                            pltpu.VMEM((TB, Cp), jnp.float32)],
        ),
        compiler_params=pltpu.CompilerParams(
            dimension_semantics=("parallel", "arbitrary"),
            vmem_limit_bytes=vmem_bytes),
        cost_estimate=cost,
    )(xp, yp, tgtp, pwp)

    return jnp.sum(partials)


def my_loss_ref(x, y_stacked, target, pos_weight_vec, *, num_exit_points, count=1):
    """Pure-JAX reference of the PyTorch module."""
    B, C = x.shape
    onehot = jax.nn.one_hot(target, C, dtype=jnp.float32)
    logp = jax.nn.log_softmax(x.astype(jnp.float32), axis=-1)
    ce = -jnp.mean(jnp.sum(onehot * logp, axis=-1))
    bce = 0.0
    for e in range(y_stacked.shape[0]):
        z = y_stacked[e].astype(jnp.float32)
        per = pos_weight_vec[None, :] * onehot * jax.nn.softplus(-z) + (
            1.0 - onehot) * jax.nn.softplus(z)
        bce = bce + (1.0 / (num_exit_points - e + 1)) * jnp.mean(per)
    return ce + bce / count


if __name__ == "__main__":
    key = jax.random.PRNGKey(0)

    # Config 1: the small "natural" shapes for this module.
    B, C, E = 8, 32, 3
    pos_weight_scalar = 2.0
    kx, ky, kt = jax.random.split(key, 3)
    x = jax.random.normal(kx, (B, C), dtype=jnp.float32)
    y_stacked = jax.random.normal(ky, (E, B, C), dtype=jnp.float32)
    target = jax.random.randint(kt, (B,), 0, C, dtype=jnp.int32)
    pos_weight_vec = jnp.ones((C,), jnp.float32) * pos_weight_scalar

    out = my_loss(x, y_stacked, target, pos_weight_vec, num_exit_points=E)
    out = jax.block_until_ready(out)
    ref = jax.block_until_ready(
        my_loss_ref(x, y_stacked, target, pos_weight_vec, num_exit_points=E))
    assert np.allclose(np.asarray(out), np.asarray(ref), rtol=1e-4, atol=1e-5), (out, ref)

    # Config 2: exercises batch tiling (NT > 1), class-dim padding/masking and
    # the exit-axis accumulator with a non-trivial grid.
    B2, C2, E2 = 24, 200, 4
    kx2, ky2, kt2 = jax.random.split(jax.random.PRNGKey(1), 3)
    x2 = jax.random.normal(kx2, (B2, C2), dtype=jnp.float32)
    y2 = jax.random.normal(ky2, (E2, B2, C2), dtype=jnp.float32)
    t2 = jax.random.randint(kt2, (B2,), 0, C2, dtype=jnp.int32)
    pw2 = jnp.ones((C2,), jnp.float32) * 1.5

    out2 = my_loss(x2, y2, t2, pw2, num_exit_points=E2, batch_tile=8)
    out2 = jax.block_until_ready(out2)
    ref2 = jax.block_until_ready(
        my_loss_ref(x2, y2, t2, pw2, num_exit_points=E2))
    assert np.allclose(np.asarray(out2), np.asarray(ref2), rtol=1e-4, atol=1e-5), (out2, ref2)

    print("KERNEL_OK")
</pallas_src>

<mosaic_0001>
module attributes {stable_mosaic.version = 11 : i64} {
  func.func @_myloss_kernel(%arg0: i32, %arg1: i32, %arg2: memref<8x128xf32, #tpu.memory_space<vmem>>, %arg3: memref<1x8x128xf32, #tpu.memory_space<vmem>>, %arg4: memref<8x1xi32, #tpu.memory_space<vmem>>, %arg5: memref<1x128xf32, #tpu.memory_space<vmem>>, %arg6: memref<1x8x128xf32, #tpu.memory_space<vmem>>, %arg7: memref<8x128xf32, #tpu.memory_space<vmem>>, %arg8: memref<8x128xf32, #tpu.memory_space<vmem>>) attributes {dimension_semantics = [#tpu.dimension_semantics<parallel>, #tpu.dimension_semantics<arbitrary>], iteration_bounds = array<i64: 1, 3>, scalar_prefetch = 0 : i64, scratch_operands = 2 : i64, tpu.core_type = #tpu.core_type<tc>, window_params = [{transform_indices = @transform_0, window_bounds = array<i64: 8, 128>}, {transform_indices = @transform_1, window_bounds = array<i64: 1, 8, 128>}, {transform_indices = @transform_2, window_bounds = array<i64: 8, 1>}, {pipeline_mode = #tpu.pipeline_mode<synchronous>, transform_indices = @transform_3, window_bounds = array<i64: 1, 128>}, {transform_indices = @transform_4, window_bounds = array<i64: 1, 8, 128>}]} {
    %0 = tpu.iota {dimensions = array<i32: 0>} : vector<8x128xi32>
    %c0_i32 = arith.constant 0 : i32
    %1 = vector.broadcast %c0_i32 : i32 to vector<8x128xi32>
    %2 = arith.cmpi eq, %0, %1 : vector<8x128xi32>
    %3 = tpu.iota {dimensions = array<i32: 1>} : vector<8x128xi32>
    %c0_i32_0 = arith.constant 0 : i32
    %4 = vector.broadcast %c0_i32_0 : i32 to vector<8x128xi32>
    %5 = arith.cmpi eq, %3, %4 : vector<8x128xi32>
    %6 = arith.andi %2, %5 : vector<8x128xi1>
    %c0_i32_1 = arith.constant 0 : i32
    %7 = arith.cmpi eq, %arg1, %c0_i32_1 : i32
    %8 = arith.extui %7 : i1 to i32
    %c0_i32_2 = arith.constant 0 : i32
    %9 = arith.cmpi ne, %8, %c0_i32_2 : i32
    scf.if %9 {
      %c0_21 = arith.constant 0 : index
      %c0_22 = arith.constant 0 : index
      %43 = vector.load %arg2[%c0_21, %c0_22] : memref<8x128xf32, #tpu.memory_space<vmem>>, vector<8x128xf32>
      %44 = tpu.iota {dimensions = array<i32: 1>} : vector<8x128xi32>
      %45 = tpu.iota {dimensions = array<i32: 0>} : vector<8x1xi32>
      %c32_i32 = arith.constant 32 : i32
      %46 = vector.broadcast %c32_i32 : i32 to vector<8x128xi32>
      %47 = arith.cmpi slt, %44, %46 : vector<8x128xi32>
      %48 = arith.extui %47 : vector<8x128xi1> to vector<8x128xi32>
      %49 = arith.sitofp %48 : vector<8x128xi32> to vector<8x128xf32>
      %c8_i32 = arith.constant 8 : i32
      %50 = arith.muli %arg0, %c8_i32 : i32
      %51 = vector.broadcast %50 : i32 to vector<8x1xi32>
      %52 = arith.addi %51, %45 : vector<8x1xi32>
      %c8_i32_23 = arith.constant 8 : i32
      %53 = vector.broadcast %c8_i32_23 : i32 to vector<8x1xi32>
      %54 = arith.cmpi slt, %52, %53 : vector<8x1xi32>
      %55 = arith.extui %54 : vector<8x1xi1> to vector<8x1xi32>
      %56 = arith.sitofp %55 : vector<8x1xi32> to vector<8x1xf32>
      %c0_24 = arith.constant 0 : index
      %c0_25 = arith.constant 0 : index
      %57 = vector.load %arg4[%c0_24, %c0_25] : memref<8x1xi32, #tpu.memory_space<vmem>>, vector<8x1xi32>
      %58 = vector.broadcast %57 : vector<8x1xi32> to vector<8x128xi32>
      %59 = arith.cmpi eq, %44, %58 : vector<8x128xi32>
      %60 = arith.extui %59 : vector<8x128xi1> to vector<8x128xi32>
      %61 = arith.sitofp %60 : vector<8x128xi32> to vector<8x128xf32>
      %62 = vector.broadcast %56 : vector<8x1xf32> to vector<8x128xf32>
      %63 = arith.mulf %62, %49 : vector<8x128xf32>
      %c0_26 = arith.constant 0 : index
      %c0_27 = arith.constant 0 : index
      %64 = vector.load %arg5[%c0_26, %c0_27] : memref<1x128xf32, #tpu.memory_space<vmem>>, vector<1x128xf32>
      %65 = vector.broadcast %64 : vector<1x128xf32> to vector<8x128xf32>
      %66 = arith.mulf %65, %61 : vector<8x128xf32>
      %67 = arith.mulf %66, %63 : vector<8x128xf32>
      %c0_28 = arith.constant 0 : index
      %c0_29 = arith.constant 0 : index
      %68 = vector.load %arg8[%c0_28, %c0_29] : memref<8x128xf32, #tpu.memory_space<vmem>>, vector<8x128xf32>
      tpu.vector_store %arg8[%c0_28, %c0_29], %67 {strides = array<i32>} : memref<8x128xf32, #tpu.memory_space<vmem>>, vector<8x128xf32>,
      %cst_30 = arith.constant 1.000000e+00 : f32
      %69 = vector.broadcast %cst_30 : f32 to vector<1x128xf32>
      %70 = arith.subf %64, %69 : vector<1x128xf32>
      %71 = vector.broadcast %70 : vector<1x128xf32> to vector<8x128xf32>
      %72 = arith.mulf %71, %61 : vector<8x128xf32>
      %cst_31 = arith.constant 1.000000e+00 : f32
      %73 = vector.broadcast %cst_31 : f32 to vector<8x128xf32>
      %74 = arith.addf %73, %72 : vector<8x128xf32>
      %75 = arith.mulf %74, %63 : vector<8x128xf32>
      %c0_32 = arith.constant 0 : index
      %c0_33 = arith.constant 0 : index
      %76 = vector.load %arg7[%c0_32, %c0_33] : memref<8x128xf32, #tpu.memory_space<vmem>>, vector<8x128xf32>
      tpu.vector_store %arg7[%c0_32, %c0_33], %75 {strides = array<i32>} : memref<8x128xf32, #tpu.memory_space<vmem>>, vector<8x128xf32>,
      %cst_34 = arith.constant -1.000000e+30 : f32
      %77 = vector.broadcast %cst_34 : f32 to vector<8x128xf32>
      %78 = arith.select %47, %43, %77 : vector<8x128xi1>, vector<8x128xf32>
      %cst_35 = arith.constant dense<0xFF800000> : vector<8xf32>
      %79 = vector.multi_reduction <maximumf>, %78, %cst_35 [1] : vector<8x128xf32> to vector<8xf32>
      %80 = vector.shape_cast %79 : vector<8xf32> to vector<8x1xf32>
      %81 = vector.broadcast %80 : vector<8x1xf32> to vector<8x128xf32>
      %82 = arith.subf %78, %81 : vector<8x128xf32>
      %83 = math.exp %82 : vector<8x128xf32>
      %cst_36 = arith.constant dense<0.000000e+00> : vector<8xf32>
      %84 = vector.multi_reduction <add>, %83, %cst_36 [1] : vector<8x128xf32> to vector<8xf32>
      %85 = vector.shape_cast %84 : vector<8xf32> to vector<8x1xf32>
      %86 = math.log %85 : vector<8x1xf32>
      %87 = arith.addf %80, %86 : vector<8x1xf32>
      %88 = arith.mulf %43, %61 : vector<8x128xf32>
      %cst_37 = arith.constant dense<0.000000e+00> : vector<8xf32>
      %89 = vector.multi_reduction <add>, %88, %cst_37 [1] : vector<8x128xf32> to vector<8xf32>
      %90 = vector.shape_cast %89 : vector<8xf32> to vector<8x1xf32>
      %91 = arith.subf %87, %90 : vector<8x1xf32>
      %92 = arith.mulf %91, %56 : vector<8x1xf32>
      %93 = vector.shape_cast %92 : vector<8x1xf32> to vector<1x8x1xf32>
      %cst_38 = arith.constant dense<0.000000e+00> : vector<1xf32>
      %94 = vector.multi_reduction <add>, %93, %cst_38 [1, 2] : vector<1x8x1xf32> to vector<1xf32>
      %95 = vector.shape_cast %94 : vector<1xf32> to vector<1x1x1xf32>
      %96 = vector.extract %95[0, 0, 0] : f32 from vector<1x1x1xf32>
      %cst_39 = arith.constant 1.250000e-01 : f32
      %97 = arith.mulf %96, %cst_39 : f32
      %cst_40 = arith.constant 0.000000e+00 : f32
      %98 = vector.broadcast %97 : f32 to vector<8x128xf32>
      %99 = vector.broadcast %cst_40 : f32 to vector<8x128xf32>
      %100 = arith.select %6, %98, %99 : vector<8x128xi1>, vector<8x128xf32>
      %c0_41 = arith.constant 0 : index
      %c0_42 = arith.constant 0 : index
      %c0_43 = arith.constant 0 : index
      %101 = vector.load %arg6[%c0_41, %c0_42, %c0_43] : memref<1x8x128xf32, #tpu.memory_space<vmem>>, vector<1x8x128xf32>
      %102 = vector.shape_cast %101 : vector<1x8x128xf32> to vector<8x128xf32>
      %103 = vector.shape_cast %100 : vector<8x128xf32> to vector<1x8x128xf32>
      tpu.vector_store %arg6[%c0_41, %c0_42, %c0_43], %103 {strides = array<i32>} : memref<1x8x128xf32, #tpu.memory_space<vmem>>, vector<1x8x128xf32>,
    } else {
    }
    %c0 = arith.constant 0 : index
    %c0_3 = arith.constant 0 : index
    %c0_4 = arith.constant 0 : index
    %10 = vector.load %arg3[%c0, %c0_3, %c0_4] : memref<1x8x128xf32, #tpu.memory_space<vmem>>, vector<1x8x128xf32>
    %11 = vector.shape_cast %10 : vector<1x8x128xf32> to vector<8x128xf32>
    %12 = math.absf %11 : vector<8x128xf32>
    %cst = arith.constant 0.000000e+00 : f32
    %13 = vector.broadcast %cst : f32 to vector<8x128xf32>
    %14 = arith.subf %13, %12 : vector<8x128xf32>
    %15 = math.exp %14 : vector<8x128xf32>
    %16 = math.log1p %15 : vector<8x128xf32>
    %cst_5 = arith.constant 0.000000e+00 : f32
    %17 = vector.broadcast %cst_5 : f32 to vector<8x128xf32>
    %18 = arith.maximumf %11, %17 : vector<8x128xf32>
    %19 = arith.addf %16, %18 : vector<8x128xf32>
    %c0_6 = arith.constant 0 : index
    %c0_7 = arith.constant 0 : index
    %20 = vector.load %arg7[%c0_6, %c0_7] : memref<8x128xf32, #tpu.memory_space<vmem>>, vector<8x128xf32>
    %21 = arith.mulf %19, %20 : vector<8x128xf32>
    %c0_8 = arith.constant 0 : index
    %c0_9 = arith.constant 0 : index
    %22 = vector.load %arg8[%c0_8, %c0_9] : memref<8x128xf32, #tpu.memory_space<vmem>>, vector<8x128xf32>
    %23 = arith.mulf %22, %11 : vector<8x128xf32>
    %24 = arith.subf %21, %23 : vector<8x128xf32>
    %25 = arith.sitofp %arg1 : i32 to f32
    %cst_10 = arith.constant 4.000000e+00 : f32
    %26 = arith.subf %cst_10, %25 : f32
    %cst_11 = arith.constant 1.000000e+00 : f32
    %27 = arith.divf %cst_11, %26 : f32
    %cst_12 = arith.constant 3.906250e-03 : f32
    %28 = arith.mulf %27, %cst_12 : f32
    %29 = vector.shape_cast %24 : vector<8x128xf32> to vector<1x8x128xf32>
    %cst_13 = arith.constant dense<0.000000e+00> : vector<1xf32>
    %30 = vector.multi_reduction <add>, %29, %cst_13 [1, 2] : vector<1x8x128xf32> to vector<1xf32>
    %31 = vector.shape_cast %30 : vector<1xf32> to vector<1x1x1xf32>
    %32 = vector.extract %31[0, 0, 0] : f32 from vector<1x1x1xf32>
    %33 = arith.mulf %32, %28 : f32
    %c0_14 = arith.constant 0 : index
    %c0_15 = arith.constant 0 : index
    %c0_16 = arith.constant 0 : index
    %34 = vector.load %arg6[%c0_14, %c0_15, %c0_16] : memref<1x8x128xf32, #tpu.memory_space<vmem>>, vector<1x8x128xf32>
    %35 = vector.shape_cast %34 : vector<1x8x128xf32> to vector<8x128xf32>
    %cst_17 = arith.constant 0.000000e+00 : f32
    %36 = vector.broadcast %33 : f32 to vector<8x128xf32>
    %37 = vector.broadcast %cst_17 : f32 to vector<8x128xf32>
    %38 = arith.select %6, %36, %37 : vector<8x128xi1>, vector<8x128xf32>
    %39 = arith.addf %35, %38 : vector<8x128xf32>
    %c0_18 = arith.constant 0 : index
    %c0_19 = arith.constant 0 : index
    %c0_20 = arith.constant 0 : index
    %40 = vector.load %arg6[%c0_18, %c0_19, %c0_20] : memref<1x8x128xf32, #tpu.memory_space<vmem>>, vector<1x8x128xf32>
    %41 = vector.shape_cast %40 : vector<1x8x128xf32> to vector<8x128xf32>
    %42 = vector.shape_cast %39 : vector<8x128xf32> to vector<1x8x128xf32>
    tpu.vector_store %arg6[%c0_18, %c0_19, %c0_20], %42 {strides = array<i32>} : memref<1x8x128xf32, #tpu.memory_space<vmem>>, vector<1x8x128xf32>,
    return
  }
  func.func @transform_0(%arg0: i32, %arg1: i32) -> (i32, i32) {
    %c0_i32 = arith.constant 0 : i32
    %c0_i32_0 = arith.constant 0 : i32
    return %arg0, %c0_i32 : i32, i32
  }
  func.func @transform_1(%arg0: i32, %arg1: i32) -> (i32, i32, i32) {
    %c0_i32 = arith.constant 0 : i32
    %c0_i32_0 = arith.constant 0 : i32
    return %arg1, %arg0, %c0_i32 : i32, i32, i32
  }
  func.func @transform_2(%arg0: i32, %arg1: i32) -> (i32, i32) {
    %c0_i32 = arith.constant 0 : i32
    %c0_i32_0 = arith.constant 0 : i32
    return %arg0, %c0_i32 : i32, i32
  }
  func.func @transform_3(%arg0: i32, %arg1: i32) -> (i32, i32) {
    %c0_i32 = arith.constant 0 : i32
    %c0_i32_0 = arith.constant 0 : i32
    %c0_i32_1 = arith.constant 0 : i32
    return %c0_i32, %c0_i32_0 : i32, i32
  }
  func.func @transform_4(%arg0: i32, %arg1: i32) -> (i32, i32, i32) {
    %c0_i32 = arith.constant 0 : i32
    %c0_i32_0 = arith.constant 0 : i32
    %c0_i32_1 = arith.constant 0 : i32
    return %arg0, %c0_i32, %c0_i32_0 : i32, i32, i32
  }
}

</mosaic_0001>

<llo_original>
// kernel: tpu_custom_call.1
$region0: #{tpu_custom_call.1}
  #allocation0 [shape = 'u32[]', space=smem, size = 0x4, offset = 0x4, fixed_abs, tag = 'smem constant byte address 0x4 - core index']
  #allocation1 [shape = 'u32[144,128]{1,0:T(1,128)}', space=vmem, size = 0x12000, scoped, tag = 'internal scratch']
  #allocation2 [shape = 'f32[8,128]{1,0:T(8,128)}', space=vmem, size = 0x1000, scoped, tag = 'scratch operand']
  #allocation3 [shape = 'f32[8,128]{1,0:T(8,128)}', space=vmem, size = 0x1000, scoped, tag = 'scratch operand']
  %s0 = inlined_call_operand.vmem [shape: f32[8,128], index: 0, kind: input, shape index: {}]
  %s1 = inlined_call_operand.hbm [shape: f32[3,8,128], index: 1, kind: input, shape index: {}]
  %s2 = inlined_call_operand.vmem [shape: s32[8,1], index: 2, kind: input, shape index: {}]
  %s3 = inlined_call_operand.vmem [shape: f32[1,128], index: 3, kind: input, shape index: {}]
  %s4 = inlined_call_operand.hbm [shape: f32[1,8,128], index: 4, kind: output, shape index: {}]
  %s5 = sld [smem:[#allocation0]]
  $region57: #{tpu_custom_call.1} parent=0
    _
  %s7 = ssub.s32 1, %s5
  %s8 = scalar_select 0, %s7, %s5
  $region1: #{tpu_custom_call.1} parent=0
    #allocation4 [shape = 'u8[8192]{0}', space=vmem, size = 0x2000, scoped, tag = 'input window, operand 1']
    #allocation5 [shape = 's32[2]{0}', space=sflag, size = 0x8, scoped, tag = 'scoped memory for tpu_custom_call.1']
    #allocation6 [shape = 's32[2]{0}', space=sflag, size = 0x8, scoped, tag = 'scoped memory for tpu_custom_call.1']
    #allocation7 [shape = 'u8[4096]{0}', space=vmem, size = 0x1000, scoped, tag = 'output window, operand 0, single buffered']
    %9 = vsyncpa [#allocation5], 0
    %s10 = scalar_lea.sflag [#allocation5], 1
    %11 = vsyncpa %s10, 0
    %12 = vsyncpa [#allocation6], 0
    loop: start=0, step=1, limit=5
    $region2: #{tpu_custom_call.1} parent=1 // loop_pre_header
      _
    $region3: #{tpu_custom_call.1} parent=1 // loop_header
      %s14 = sphi 0, %s18
      %p15 = scmp.ge.s32.totalorder %s14, 5
      %s21 = sphi 0, %s33
      %s22 = sphi 0, %s29
      %s23 = sphi 0, %s21
      %s24 = sphi 0, %s22
      %s25 = sphi 0, %s23
      %s26 = sphi 0, %s24
      %s36 = sphi 0, %s38
      %s39 = sphi 0, %s36
      %s40 = sphi 0, %s39
      %s56 = sphi 0, %s40
      %s64 = sphi 0, %s66
      %s67 = sphi 0, %s64
      %s68 = sphi 0, %s67
      %s84 = sphi 0, %s68
      %s90 = sphi 0, %s92
      %s93 = sphi 0, %s90
      %s94 = sphi 0, %s93
      %s110 = sphi 0, %s94
      %s114 = sphi 0, %s114
      %s116 = sphi 0, %s114
      %s117 = sphi 0, %s116
      %s131 = sphi 0, %s117
      %s137 = sphi 0, %s139
      %s140 = sphi 0, %s137
      %s141 = sphi 0, %s140
      %s157 = sphi 0, %s141
    $region4: #{tpu_custom_call.1} parent=1 // loop_header_branch
      %17 = sbr.rel (%p15) target = $region8
    $region5: #{tpu_custom_call.1} parent=1 // loop_body
      %s19 = ssub.s32 %s14, 1
      %s20 = ssub.s32 %s14, 2
      %s27 = sadd.s32 1, %s22
      %p28 = scmp.ge.s32.totalorder %s27, 3
      %s29 = scalar_select %p28, 0, %s27
      %s30 = sadd.s32 1, %s21
      %s31 = scalar_select %p28, %s30, %s21
      %p32 = scmp.ge.s32.totalorder %s31, 1
      %s33 = scalar_select %p32, 0, %s31
      %s34 = ssub.s32 %s21, %s33
      %p35 = scmp.eq.s32.totalorder %s34, 0
      %s37 = sadd.s32 %s36, 1
      %s38 = scalar_select %p35, %s36, %s37
      %p41 = pneg %p35
      %p42 = scmp.eq.s32.totalorder %s14, 2
      %p43 = por %p41, %p42
      %p44 = scmp.ne.s32.totalorder %s36, %s39
      %p45 = scmp.eq.s32.totalorder %s14, 0
      %p46 = por %p44, %p45
      %p47 = scmp.ne.s32.totalorder %s36, %s39
      %p48 = scmp.eq.s32.totalorder %s19, 2
      %p49 = por %p47, %p48
      %p50 = scmp.ne.s32.totalorder %s39, %s40
      %p51 = scmp.eq.s32.totalorder %s19, 0
      %p52 = por %p50, %p51
      %p53 = scmp.ne.s32.totalorder %s39, %s40
      %p54 = scmp.eq.s32.totalorder %s20, 2
      %p55 = por %p53, %p54
      %p57 = scmp.ne.s32.totalorder %s40, %s56
      %p58 = scmp.eq.s32.totalorder %s20, 0
      %p59 = por %p57, %p58
      %s60 = ssub.s32 %s22, %s29
      %s61 = ssub.s32 %s21, %s33
      %s62 = sor.u32 %s60, %s61
      %p63 = scmp.eq.s32.totalorder %s62, 0
      %s65 = sadd.s32 %s64, 1
      %s66 = scalar_select %p63, %s64, %s65
      %p69 = pneg %p63
      %p70 = scmp.eq.s32.totalorder %s14, 2
      %p71 = por %p69, %p70
      %p72 = scmp.ne.s32.totalorder %s64, %s67
      %p73 = scmp.eq.s32.totalorder %s14, 0
      %p74 = por %p72, %p73
      %p75 = scmp.ne.s32.totalorder %s64, %s67
      %p76 = scmp.eq.s32.totalorder %s19, 2
      %p77 = por %p75, %p76
      %p78 = scmp.ne.s32.totalorder %s67, %s68
      %p79 = scmp.eq.s32.totalorder %s19, 0
      %p80 = por %p78, %p79
      %p81 = scmp.ne.s32.totalorder %s67, %s68
      %p82 = scmp.eq.s32.totalorder %s20, 2
      %p83 = por %p81, %p82
      %p85 = scmp.ne.s32.totalorder %s68, %s84
      %p86 = scmp.eq.s32.totalorder %s20, 0
      %p87 = por %p85, %p86
      %s88 = ssub.s32 %s21, %s33
      %p89 = scmp.eq.s32.totalorder %s88, 0
      %s91 = sadd.s32 %s90, 1
      %s92 = scalar_select %p89, %s90, %s91
      %p95 = pneg %p89
      %p96 = scmp.eq.s32.totalorder %s14, 2
      %p97 = por %p95, %p96
      %p98 = scmp.ne.s32.totalorder %s90, %s93
      %p99 = scmp.eq.s32.totalorder %s14, 0
      %p100 = por %p98, %p99
      %p101 = scmp.ne.s32.totalorder %s90, %s93
      %p102 = scmp.eq.s32.totalorder %s19, 2
      %p103 = por %p101, %p102
      %p104 = scmp.ne.s32.totalorder %s93, %s94
      %p105 = scmp.eq.s32.totalorder %s19, 0
      %p106 = por %p104, %p105
      %p107 = scmp.ne.s32.totalorder %s93, %s94
      %p108 = scmp.eq.s32.totalorder %s20, 2
      %p109 = por %p107, %p108
      %p111 = scmp.ne.s32.totalorder %s94, %s110
      %p112 = scmp.eq.s32.totalorder %s20, 0
      %p113 = por %p111, %p112
      %s115 = sadd.s32 %s114, 1
      %p118 = scmp.eq.s32.totalorder %s14, 2
      %p119 = scmp.ne.s32.totalorder %s114, %s116
      %p120 = scmp.eq.s32.totalorder %s14, 0
      %p121 = por %p119, %p120
      %p122 = scmp.ne.s32.totalorder %s114, %s116
      %p123 = scmp.eq.s32.totalorder %s19, 2
      %p124 = por %p122, %p123
      %p125 = scmp.ne.s32.totalorder %s116, %s117
      %p126 = scmp.eq.s32.totalorder %s19, 0
      %p127 = por %p125, %p126
      %p128 = scmp.ne.s32.totalorder %s116, %s117
      %p129 = scmp.eq.s32.totalorder %s20, 2
      %p130 = por %p128, %p129
      %p132 = scmp.ne.s32.totalorder %s117, %s131
      %p133 = scmp.eq.s32.totalorder %s20, 0
      %p134 = por %p132, %p133
      %s135 = ssub.s32 %s21, %s33
      %p136 = scmp.eq.s32.totalorder %s135, 0
      %s138 = sadd.s32 %s137, 1
      %s139 = scalar_select %p136, %s137, %s138
      %p142 = pneg %p136
      %p143 = scmp.eq.s32.totalorder %s14, 2
      %p144 = por %p142, %p143
      %p145 = scmp.ne.s32.totalorder %s137, %s140
      %p146 = scmp.eq.s32.totalorder %s14, 0
      %p147 = por %p145, %p146
      %p148 = scmp.ne.s32.totalorder %s137, %s140
      %p149 = scmp.eq.s32.totalorder %s19, 2
      %p150 = por %p148, %p149
      %p151 = scmp.ne.s32.totalorder %s140, %s141
      %p152 = scmp.eq.s32.totalorder %s19, 0
      %p153 = por %p151, %p152
      %p154 = scmp.ne.s32.totalorder %s140, %s141
      %p155 = scmp.eq.s32.totalorder %s20, 2
      %p156 = por %p154, %p155
      %p158 = scmp.ne.s32.totalorder %s141, %s157
      %p159 = scmp.eq.s32.totalorder %s20, 0
      %p160 = por %p158, %p159
      %p161 = scmp.le.s32.totalorder 1, %s14
      %p162 = scmp.lt.s32.totalorder %s14, 4
      %p163 = pnand %p161, %p162
      %p164 = pneg %p163
      // Predicated region
      $region9: #{tpu_custom_call.1} parent=5 // pred_check
        _
      $region10: #{tpu_custom_call.1} parent=5 // pred_check_branch
        %166 = sbr.rel (%p163) target = $region12
      $region11: #{tpu_custom_call.1} parent=5 // pred_region
        %s167 = ssub.s32 %s14, 1
        // Predicated region
        $region13: #{tpu_custom_call.1} parent=11 // pred_check
          %p168 = pneg %p52
        $region14: #{tpu_custom_call.1} parent=11 // pred_check_branch
          %170 = sbr.rel (%p168) target = $region16
        $region15: #{tpu_custom_call.1} parent=11 // pred_region
          %p171 = scmp.lt.s32.totalorder %s23, 0
          %s172 = scalar_select %p171, %s23, 0
          %s173 = smul.addr %s172, 8
          %s174 = scalar_lea.vmem %s0, %s173
        $region16: #{tpu_custom_call.1} parent=11 // pred_fallthru
          _
        // Predicated region
        $region17: #{tpu_custom_call.1} parent=11 // pred_check
          %p175 = pneg %p106
        $region18: #{tpu_custom_call.1} parent=11 // pred_check_branch
          %177 = sbr.rel (%p175) target = $region20
        $region19: #{tpu_custom_call.1} parent=11 // pred_region
          %p178 = scmp.lt.s32.totalorder %s23, 0
          %s179 = scalar_select %p178, %s23, 0
          %s180 = smul.addr %s179, 8
          %s181 = scalar_lea.vmem %s2, %s180
        $region20: #{tpu_custom_call.1} parent=11 // pred_fallthru
          _
        // Predicated region
        $region21: #{tpu_custom_call.1} parent=11 // pred_check
          %p182 = pneg %p127
        $region22: #{tpu_custom_call.1} parent=11 // pred_check_branch
          %184 = sbr.rel (%p182) target = $region24
        $region23: #{tpu_custom_call.1} parent=11 // pred_region
          _
        $region24: #{tpu_custom_call.1} parent=11 // pred_fallthru
          _
      $region12: #{tpu_custom_call.1} parent=5 // pred_fallthru
        _
      %p185 = scmp.lt.s32.totalorder %s14, 3
      // Predicated region
      $region25: #{tpu_custom_call.1} parent=5 // pred_check
        %p186 = pneg %p185
      $region26: #{tpu_custom_call.1} parent=5 // pred_check_branch
        %188 = sbr.rel (%p186) target = $region28
      $region27: #{tpu_custom_call.1} parent=5 // pred_region
        // Predicated region
        $region29: #{tpu_custom_call.1} parent=27 // pred_check
          %p189 = pneg %p74
        $region30: #{tpu_custom_call.1} parent=27 // pred_check_branch
          %191 = sbr.rel (%p189) target = $region32
        $region31: #{tpu_custom_call.1} parent=27 // pred_region
          %s192 = sand.u32 %s64, 1
          %s193 = scalar_lea.sflag [#allocation5], %s192
          %s194 = sand.u32 %s64, 1
          %s195 = smul.addr %s194, 8
          %s196 = scalar_lea.vmem [#allocation4], %s195
          %s198 = ssub.s32 128, 128
          %199 = vsyncadd %s193, %s198
          %s200 = sadd.s32 %s21, %s22
          %s201 = smul.addr %s200, 128
          %s202 = scalar_lea.hbm %s1, %s201
          %s204 = sshll.u32 %s196, 4
          %s205 = int_to_ptr.vmem [resolvable:$true] %s204
          %207 = dma.hbm_to_vmem [thread:$0]  %s202, 128, %s205, %s193
        $region32: #{tpu_custom_call.1} parent=27 // pred_fallthru
          _
      $region28: #{tpu_custom_call.1} parent=5 // pred_fallthru
        _
      %p208 = scmp.le.s32.totalorder 1, %s14
      %p209 = scmp.lt.s32.totalorder %s14, 4
      %p210 = pnand %p208, %p209
      %p211 = pneg %p210
      // Predicated region
      $region33: #{tpu_custom_call.1} parent=5 // pred_check
        _
      $region34: #{tpu_custom_call.1} parent=5 // pred_check_branch
        %213 = sbr.rel (%p210) target = $region36
      $region35: #{tpu_custom_call.1} parent=5 // pred_region
        %s214 = ssub.s32 %s14, 1
        %s215 = sand.u32 %s67, 1
        %s216 = scalar_lea.sflag [#allocation5], %s215
        %s217 = sand.u32 %s67, 1
        %s218 = smul.addr %s217, 8
        %s219 = scalar_lea.vmem [#allocation4], %s218
        // Predicated region
        $region37: #{tpu_custom_call.1} parent=35 // pred_check
          %p220 = pneg %p80
        $region38: #{tpu_custom_call.1} parent=35 // pred_check_branch
          %222 = sbr.rel (%p220) target = $region40
        $region39: #{tpu_custom_call.1} parent=35 // pred_region
          %223 = dma.done %s216, 128
        $region40: #{tpu_custom_call.1} parent=35 // pred_fallthru
          _
        %p224 = scmp.lt.s32.totalorder %s23, 0
        %s225 = scalar_select %p224, %s23, 0
        %s226 = smul.addr %s225, 8
        %s227 = scalar_lea.vmem %s0, %s226
        %p228 = pneg %p52
        %p229 = pneg %p49
        %s230 = sand.u32 %s67, 1
        %s231 = scalar_lea.sflag [#allocation5], %s230
        %s232 = sand.u32 %s67, 1
        %s233 = smul.addr %s232, 8
        %s234 = scalar_lea.vmem [#allocation4], %s233
        %p235 = pneg %p80
        %p236 = pneg %p77
        %p237 = scmp.lt.s32.totalorder %s23, 0
        %s238 = scalar_select %p237, %s23, 0
        %s239 = smul.addr %s238, 8
        %s240 = scalar_lea.vmem %s2, %s239
        %p241 = pneg %p106
        %p242 = pneg %p103
        %p243 = pneg %p127
        %p244 = pneg %p124
        %p245 = pneg %p153
        %p246 = pneg %p150
        %p247 = scmp.lt.s32.totalorder %s23, 0
        %s248 = scalar_select %p247, %s23, 0
        %s249 = smul.addr %s248, 8
        %s250 = scalar_lea.vmem %s0, %s249
        %p251 = scmp.lt.s32.totalorder %s23, 0
        %s252 = scalar_select %p251, %s23, 0
        %s253 = smul.addr %s252, 8
        %s254 = scalar_lea.vmem %s2, %s253
        %v255 = vlaneseq
        %v256 = vshrl.u32 %v255, 7
        %vm257 = vcmp.eq.s32.totalorder %v256, 0
        %v258 = vlaneseq
        %v259 = vand.u32 %v258, 127
        %vm260 = vcmp.eq.s32.totalorder %v259, 0
        %vm261 = vmand %vm257, %vm260
        %p262 = scmp.eq.s32.totalorder %s24, 0
        // Predicated region
        $region41: #{tpu_custom_call.1} parent=35 // pred_check
          %p263 = pneg %p262
        $region42: #{tpu_custom_call.1} parent=35 // pred_check_branch
          %265 = sbr.rel (%p263) target = $region44
        $region43: #{tpu_custom_call.1} parent=35 // pred_region
          %v266 = vld [vmem:[%s250] sm:$0xff]
          %vm267 = vcmp.lt.s32.totalorder %v259, 32
          %v268 = vsel %vm267, 1, 0
          %v269 = vcvt.s32.f32 %v268
          %s270 = smul.u32 %s23, 8
          %v271 = vstv %s270
          %v272 = vadd.s32 %v271, %v256
          %vm273 = vcmp.lt.s32.totalorder %v272, 8
          %v274 = vsel %vm273, 1, 0
          %v275 = vcvt.s32.f32 %v274
          %v276 = vld [vmem:[%s254] sm:$0xff]
          %277 = vset.pattern.permute.xlu0 0
          %278 = vperm.xlu0 %277, %v276
          %v279 = vpop.permute.xlu0 %278
          %vm280 = vcmp.eq.s32.totalorder %v259, %v279
          %v281 = vsel %vm280, 1, 0
          %v282 = vcvt.s32.f32 %v281
          %v283 = vmul.f32 %v275, %v269
          %v284 = vld [vmem:[%s3] sm:$0x1]
          %v286 = vlaneseq
          %v287 = vshrl.u32 %v286, 7
          %v288 = vsub.s32 0, %v287
          %v289 = vrot.slane %v284, %v288
          %v291 = vmul.f32 %v289, %v282
          %v292 = vmul.f32 %v291, %v283
          %293 = vst [vmem:[#allocation3] sm:$0xff] %v292
          %v294 = vsub.f32 %v284, 1.0
          %v296 = vlaneseq
          %v297 = vshrl.u32 %v296, 7
          %v298 = vsub.s32 0, %v297
          %v299 = vrot.slane %v294, %v298
          %v301 = vmul.f32 %v299, %v282
          %v302 = vadd.f32 %v301, 1.0
          %v303 = vmul.f32 %v302, %v283
          %304 = vst [vmem:[#allocation2] sm:$0xff] %v303
          %v305 = vsel %vm267, %v266, -1e+30
          %306 = vmax.xlane.f32.xlu0 %v305
          %v307 = vpop.xlane.xlu0 %306
          %v308 = vsub.f32 %v305, %v307
          %v309 = vmul.f32 %v308, 1.442695
          %v310 = vpow.pop %v309
          %311 = vadd.xlane.f32.xlu0 %v310
          %v312 = vpop.xlane.xlu0 %311
          %v313 = vlog2.pop %v312
          %v314 = vmul.f32 %v313, 0.6931472
          %v315 = vadd.f32 %v307, %v314
          %v316 = vmul.f32 %v266, %v282
          %317 = vadd.xlane.f32.xlu0 %v316
          %v318 = vpop.xlane.xlu0 %317
          %v319 = vsub.f32 %v315, %v318
          %v320 = vmul.f32 %v319, %v275
          %vm321 = vcmask 7168
          %v322 = vsel %vm321, %v320, 0.0
          %323 = vadd.xlane.f32.xlu0 %v322
          %v324 = vpop.xlane.xlu0 %323
          %v325 = vrot.slane %v324, 4
          %v326 = vadd.f32 %v324, %v325
          %v327 = vrot.slane %v326, 2
          %v328 = vadd.f32 %v326, %v327
          %v329 = vrot.slane %v328, 1
          %v330 = vadd.f32 %v328, %v329
          %s331 = vtos %v330
          %s332 = smul.f32 %s331, 0.125
          %v333 = vstv %s332
          %v334 = vsel %vm261, %v333, 0.0
          %335 = vst [vmem:[#allocation7] sm:$0xff] %v334
        $region44: #{tpu_custom_call.1} parent=35 // pred_fallthru
          _
        %v336 = vld [vmem:[%s219] sm:$0xff]
        %v337 = vand.u32 2147483647, %v336
        %v338 = vsub.f32 0.0, %v337
        %v339 = vmul.f32 %v338, 1.442695
        %v340 = vpow.pop %v339
        %v341 = vadd.f32 %v340, 1.0
        %v342 = vlog2.pop %v341
        %v343 = vmul.f32 %v342, 0.6931472
        %v344 = vmul.f32 -0.5, %v340
        %v345 = vadd.f32 %v344, 1.0
        %v346 = vmul.f32 %v345, %v340
        %v347 = vand.u32 2147483647, %v340
        %vm348 = vcmp.lt.f32.partialorder %v347, 0.0004427343
        %v349 = vsel %vm348, %v346, %v343
        %v350 = vmax.f32 %v336, 0.0
        %v351 = vadd.f32 %v349, %v350
        %v352 = vld [vmem:[#allocation2] sm:$0xff]
        %v353 = vmul.f32 %v351, %v352
        %v354 = vld [vmem:[#allocation3] sm:$0xff]
        %v355 = vmul.f32 %v354, %v336
        %v356 = vsub.f32 %v353, %v355
        %s357 = scvt.s32.f32 %s24
        %s358 = ssub.f32 4.0, %s357
        %v359 = vstv %s358
        %v360 = vrcp.pop %v359
        %s361 = vtos %v360
        %s362 = smul.f32 %s361, 0.00390625
        %363 = vadd.xlane.f32.xlu0 %v356
        %v364 = vpop.xlane.xlu0 %363
        %v365 = vrot.slane %v364, 4
        %v366 = vadd.f32 %v364, %v365
        %v367 = vrot.slane %v366, 2
        %v368 = vadd.f32 %v366, %v367
        %v369 = vrot.slane %v368, 1
        %v370 = vadd.f32 %v368, %v369
        %s371 = vtos %v370
        %s372 = smul.f32 %s371, %s362
        %v373 = vld [vmem:[#allocation7] sm:$0xff]
        %v374 = vstv %s372
        %v375 = vsel %vm261, %v374, 0.0
        %v376 = vadd.f32 %v373, %v375
        %377 = vst [vmem:[#allocation7] sm:$0xff] %v376
        // Predicated region
        $region45: #{tpu_custom_call.1} parent=35 // pred_check
          %p378 = pneg %p150
        $region46: #{tpu_custom_call.1} parent=35 // pred_check_branch
          %380 = sbr.rel (%p378) target = $region48
        $region47: #{tpu_custom_call.1} parent=35 // pred_region
          %s382 = ssub.s32 128, 128
          %383 = vsyncadd [#allocation6], %s382
          %s384 = smul.addr %s23, 128
          %s385 = scalar_lea.hbm %s4, %s384
          %s387 = sshll.u32 [#allocation7], 4
          %s388 = int_to_ptr.vmem [resolvable:$true] %s387
          %390 = dma.vmem_to_hbm [thread:$0]  %s388, 128, %s385, [#allocation6]
        $region48: #{tpu_custom_call.1} parent=35 // pred_fallthru
          _
        // Predicated region
        $region49: #{tpu_custom_call.1} parent=35 // pred_check
          %p391 = pneg %p150
        $region50: #{tpu_custom_call.1} parent=35 // pred_check_branch
          %393 = sbr.rel (%p391) target = $region52
        $region51: #{tpu_custom_call.1} parent=35 // pred_region
          %394 = dma.done [#allocation6], 128
        $region52: #{tpu_custom_call.1} parent=35 // pred_fallthru
          _
      $region36: #{tpu_custom_call.1} parent=5 // pred_fallthru
        _
      %p395 = scmp.le.s32.totalorder 2, %s14
      // Predicated region
      $region53: #{tpu_custom_call.1} parent=5 // pred_check
        %p396 = pneg %p395
      $region54: #{tpu_custom_call.1} parent=5 // pred_check_branch
        %398 = sbr.rel (%p396) target = $region56
      $region55: #{tpu_custom_call.1} parent=5 // pred_region
        %s399 = ssub.s32 %s14, 2
      $region56: #{tpu_custom_call.1} parent=5 // pred_fallthru
        _
    $region6: #{tpu_custom_call.1} parent=1 // loop_footer
      %s18 = sadd.s32 1, %s14
    $region7: #{tpu_custom_call.1} parent=1 // loop_footer_branch
      %13 = sbr.rel target = $region3
    $region8: #{tpu_custom_call.1} parent=1 // loop_exit
      _
    %400 = vsyncpa [#allocation5], 1
    %s401 = scalar_lea.sflag [#allocation5], 1
    %402 = vsyncpa %s401, 1
    %403 = vsyncpa [#allocation6], 1
    %s404 = scalar_lea.sflag [#allocation6], 1
    %405 = vsyncpa %s404, 1

</llo_original>
